<compile_context>
chip_gen: v5e
topology: v5e:2x2
jax: 0.10.0
libtpu: 0.0.40
codegen_flags: <defaults>
</compile_context>

<pallas_src>
import functools

import jax
import jax.numpy as jnp
from jax.experimental import pallas as pl
from jax.experimental.pallas import tpu as pltpu

NEG_SLOPE = 0.01              # nn.LeakyReLU default negative_slope
LANE = 128                    # TPU lane width
DEFAULT_TILE_B = 32 * 1024    # batch lanes per grid step (review: 16K-32K+)
SPLIT_THRESHOLD = 16 * 1024   # >= this many batch lanes -> force >= 2 grid steps


def _round_up(n, m):
    return ((n + m - 1) // m) * m


def _leaky_relu(x):
    # max(x, 0.01*x) == LeakyReLU(0.01); saves one VPU op vs where(x>=0, ...).
    return jnp.maximum(x, NEG_SLOPE * x)


def _mlp_kernel(xt_ref, w1_ref, b1_ref, w2_ref, b2_ref, o_ref, *, compute_dtype):
    # One batch tile of the fused 2-layer MLP; batch lives on lanes.
    xt = xt_ref[...].astype(compute_dtype)                        # (F_in, tile)

    # Layer 1: h = leaky_relu(W1 @ xT + b1)                       # (H, tile)
    h = jnp.dot(w1_ref[...], xt, preferred_element_type=jnp.float32)
    h = _leaky_relu(h + b1_ref[...])

    # Dropout(p=0.0) == identity.

    # Layer 2: y = leaky_relu(W2 @ h + b2)                        # (F_out, tile)
    y = jnp.dot(w2_ref[...], h.astype(compute_dtype),
                preferred_element_type=jnp.float32)
    y = _leaky_relu(y + b2_ref[...])

    o_ref[...] = y.astype(o_ref.dtype)


def _choose_tile(b_pad, tile_b):
    tile = min(_round_up(tile_b, LANE), b_pad)
    if b_pad >= SPLIT_THRESHOLD:
        # At least 2 grid steps so ("parallel",) can shard the batch across
        # TensorCores (v7x has 2 TCs/chip); each step still >= 8K lanes.
        tile = min(tile, _round_up(pl.cdiv(b_pad, 2), LANE))
    return max(tile, LANE)


def _mlp_forward_t(xt, w1, b1, w2, b2, tile_b, compute_dtype):
    """Core: xt (F_in, B) -> (F_out, B); batch stays on lanes end to end."""
    F_in, B = xt.shape
    H = w1.shape[0]
    F_out = w2.shape[0]

    # Pad the batch only up to a lane multiple (not a full tile); Pallas masks
    # the partial edge block when `tile` does not divide B_pad.
    B_pad = _round_up(B, LANE)
    if B_pad != B:
        xt = jnp.pad(xt, ((0, 0), (0, B_pad - B)))

    tile = _choose_tile(B_pad, tile_b)
    grid = (pl.cdiv(B_pad, tile),)

    # bf16 MXU operands (single-pass), f32 accumulation; biases stay f32.
    w1c = w1.astype(compute_dtype)
    w2c = w2.astype(compute_dtype)
    b1c = b1.reshape(H, 1).astype(jnp.float32)
    b2c = b2.reshape(F_out, 1).astype(jnp.float32)

    cost = pl.CostEstimate(
        flops=2 * B_pad * (F_in * H + H * F_out),
        transcendentals=0,
        bytes_accessed=(xt.dtype.itemsize * B_pad * F_in
                        + 4 * B_pad * F_out
                        + w1c.dtype.itemsize * (H * F_in + F_out * H)
                        + 4 * (H + F_out)),
    )

    kernel = functools.partial(_mlp_kernel, compute_dtype=compute_dtype)

    out_t = pl.pallas_call(
        kernel,
        out_shape=jax.ShapeDtypeStruct((F_out, B_pad), xt.dtype),
        grid_spec=pltpu.PrefetchScalarGridSpec(
            num_scalar_prefetch=0,
            grid=grid,
            in_specs=[
                pl.BlockSpec((F_in, tile), lambda i: (0, i)),   # xT tile (lane dense)
                pl.BlockSpec((H, F_in), lambda i: (0, 0)),      # W1 (VMEM resident)
                pl.BlockSpec((H, 1), lambda i: (0, 0)),         # b1
                pl.BlockSpec((F_out, H), lambda i: (0, 0)),     # W2
                pl.BlockSpec((F_out, 1), lambda i: (0, 0)),     # b2
            ],
            out_specs=pl.BlockSpec((F_out, tile), lambda i: (0, i)),
        ),
        compiler_params=pltpu.CompilerParams(
            dimension_semantics=("parallel",),        # shard batch across TCs
            vmem_limit_bytes=48 * 1024 * 1024,        # fits v7x 64 MiB physical VMEM
        ),
        cost_estimate=cost,
    )(xt, w1c, b1c, w2c, b2c)

    if B_pad != B:
        out_t = out_t[:, :B]
    return out_t


@functools.partial(jax.jit, static_argnames=("tile_b", "compute_dtype"))
def mlp_pallas_t(xt, w1, b1, w2, b2, *, tile_b=DEFAULT_TILE_B,
                 compute_dtype=jnp.bfloat16):
    """Hot path (review option (a)): xt is (F_in, B); returns (F_out, B).

    No wrapper-side transpose/pad-to-tile HBM round trips: callers keep the
    batch on the last (lane) dimension end to end.
    """
    return _mlp_forward_t(xt, w1, b1, w2, b2, tile_b, compute_dtype)


@functools.partial(jax.jit, static_argnames=("tile_b", "compute_dtype"))
def mlp_pallas(x, w1, b1, w2, b2, *, tile_b=DEFAULT_TILE_B,
               compute_dtype=jnp.bfloat16):
    """PyTorch-layout shim: x is (B, F_in); returns (B, F_out).

    Matches the nn.Module interface; the two boundary transposes are the only
    extra HBM traffic.  Prefer mlp_pallas_t for throughput-critical callers.
    """
    out_t = _mlp_forward_t(jnp.transpose(x), w1, b1, w2, b2, tile_b, compute_dtype)
    return jnp.transpose(out_t)


def init_linear_params(key, fan_in, fan_out):
    # PyTorch nn.Linear default init: U(-1/sqrt(fan_in), 1/sqrt(fan_in)).
    kw, kb = jax.random.split(key)
    bound = 1.0 / float(fan_in) ** 0.5
    w = jax.random.uniform(kw, (fan_out, fan_in), jnp.float32, -bound, bound)
    b = jax.random.uniform(kb, (fan_out,), jnp.float32, -bound, bound)
    return w, b


def mlp_reference(x, w1, b1, w2, b2, compute_dtype=jnp.float32):
    cd = compute_dtype
    h = jnp.dot(x.astype(cd), w1.T.astype(cd),
                preferred_element_type=jnp.float32) + b1
    h = jnp.maximum(h, NEG_SLOPE * h)
    y = jnp.dot(h.astype(cd), w2.T.astype(cd),
                preferred_element_type=jnp.float32) + b2
    y = jnp.maximum(y, NEG_SLOPE * y)
    return y


if __name__ == "__main__":
    key = jax.random.PRNGKey(0)
    k_x, k_l1, k_l2 = jax.random.split(key, 3)

    size_list = [7, 64, 2]
    B = 16  # small demo batch; padded to a single 128-lane tile

    x = jax.random.normal(k_x, (B, size_list[0]), jnp.float32)
    w1, b1 = init_linear_params(k_l1, size_list[0], size_list[1])   # (64, 7), (64,)
    w2, b2 = init_linear_params(k_l2, size_list[1], size_list[2])   # (2, 64), (2,)

    # PyTorch-layout entry point (matches the nn.Module interface).
    out = jax.block_until_ready(mlp_pallas(x, w1, b1, w2, b2))

    # Transposed hot-path entry point (no wrapper transposes).
    out_t = jax.block_until_ready(mlp_pallas_t(jnp.transpose(x), w1, b1, w2, b2))

    ref_bf16 = mlp_reference(x, w1, b1, w2, b2, compute_dtype=jnp.bfloat16)
    ref_f32 = mlp_reference(x, w1, b1, w2, b2, compute_dtype=jnp.float32)

    assert out.shape == (B, size_list[-1])
    assert out_t.shape == (size_list[-1], B)
    assert jnp.allclose(out, jnp.transpose(out_t), atol=1e-5, rtol=1e-5), \
        "layout paths disagree"
    assert jnp.allclose(out, ref_bf16, atol=1e-3, rtol=1e-3), \
        "mismatch vs precision-matched reference"
    assert jnp.allclose(out, ref_f32, atol=5e-2, rtol=5e-2), \
        "mismatch vs f32 reference"

    print("KERNEL_OK")
</pallas_src>

<mosaic_0001>
module attributes {stable_mosaic.version = 11 : i64} {
  func.func @_mlp_kernel(%arg0: i32, %arg1: memref<7x128xf32, #tpu.memory_space<vmem>>, %arg2: memref<64x7xbf16, #tpu.memory_space<vmem>>, %arg3: memref<64x1xf32, #tpu.memory_space<vmem>>, %arg4: memref<2x64xbf16, #tpu.memory_space<vmem>>, %arg5: memref<2x1xf32, #tpu.memory_space<vmem>>, %arg6: memref<2x128xf32, #tpu.memory_space<vmem>>) attributes {dimension_semantics = [#tpu.dimension_semantics<parallel>], iteration_bounds = array<i64: 1>, scalar_prefetch = 0 : i64, scratch_operands = 0 : i64, tpu.core_type = #tpu.core_type<tc>, window_params = [{transform_indices = @transform_0, window_bounds = array<i64: 7, 128>}, {pipeline_mode = #tpu.pipeline_mode<synchronous>, transform_indices = @transform_1, window_bounds = array<i64: 64, 7>}, {pipeline_mode = #tpu.pipeline_mode<synchronous>, transform_indices = @transform_2, window_bounds = array<i64: 64, 1>}, {pipeline_mode = #tpu.pipeline_mode<synchronous>, transform_indices = @transform_3, window_bounds = array<i64: 2, 64>}, {pipeline_mode = #tpu.pipeline_mode<synchronous>, transform_indices = @transform_4, window_bounds = array<i64: 2, 1>}, {transform_indices = @transform_5, window_bounds = array<i64: 2, 128>}]} {
    %c0 = arith.constant 0 : index
    %c0_0 = arith.constant 0 : index
    %0 = vector.load %arg1[%c0, %c0_0] : memref<7x128xf32, #tpu.memory_space<vmem>>, vector<7x128xf32>
    %1 = arith.truncf %0 : vector<7x128xf32> to vector<7x128xbf16>
    %c0_1 = arith.constant 0 : index
    %c0_2 = arith.constant 0 : index
    %2 = vector.load %arg2[%c0_1, %c0_2] : memref<64x7xbf16, #tpu.memory_space<vmem>>, vector<64x7xbf16>
    %cst = arith.constant dense<0.000000e+00> : vector<64x128xf32>
    %3 = tpu.matmul %2, %1, %cst {dimension_numbers = #tpu.dot_dimension_numbers<[1], [0], [0], [1], [0, 0, 1, 1], [], []>} : vector<64x7xbf16>, vector<7x128xbf16>, vector<64x128xf32> -> vector<64x128xf32>
    %c0_3 = arith.constant 0 : index
    %c0_4 = arith.constant 0 : index
    %4 = vector.load %arg3[%c0_3, %c0_4] : memref<64x1xf32, #tpu.memory_space<vmem>>, vector<64x1xf32>
    %5 = vector.broadcast %4 : vector<64x1xf32> to vector<64x128xf32>
    %6 = arith.addf %3, %5 : vector<64x128xf32>
    %cst_5 = arith.constant 0.00999999977 : f32
    %7 = vector.broadcast %cst_5 : f32 to vector<64x128xf32>
    %8 = arith.mulf %7, %6 : vector<64x128xf32>
    %9 = arith.maximumf %6, %8 : vector<64x128xf32>
    %c0_6 = arith.constant 0 : index
    %c0_7 = arith.constant 0 : index
    %10 = vector.load %arg4[%c0_6, %c0_7] : memref<2x64xbf16, #tpu.memory_space<vmem>>, vector<2x64xbf16>
    %11 = arith.truncf %9 : vector<64x128xf32> to vector<64x128xbf16>
    %cst_8 = arith.constant dense<0.000000e+00> : vector<2x128xf32>
    %12 = tpu.matmul %10, %11, %cst_8 {dimension_numbers = #tpu.dot_dimension_numbers<[1], [0], [0], [1], [0, 0, 1, 1], [], []>} : vector<2x64xbf16>, vector<64x128xbf16>, vector<2x128xf32> -> vector<2x128xf32>
    %c0_9 = arith.constant 0 : index
    %c0_10 = arith.constant 0 : index
    %13 = vector.load %arg5[%c0_9, %c0_10] : memref<2x1xf32, #tpu.memory_space<vmem>>, vector<2x1xf32>
    %14 = vector.broadcast %13 : vector<2x1xf32> to vector<2x128xf32>
    %15 = arith.addf %12, %14 : vector<2x128xf32>
    %cst_11 = arith.constant 0.00999999977 : f32
    %16 = vector.broadcast %cst_11 : f32 to vector<2x128xf32>
    %17 = arith.mulf %16, %15 : vector<2x128xf32>
    %18 = arith.maximumf %15, %17 : vector<2x128xf32>
    %c0_12 = arith.constant 0 : index
    %c0_13 = arith.constant 0 : index
    %19 = vector.load %arg6[%c0_12, %c0_13] : memref<2x128xf32, #tpu.memory_space<vmem>>, vector<2x128xf32>
    tpu.vector_store %arg6[%c0_12, %c0_13], %18 {strides = array<i32>} : memref<2x128xf32, #tpu.memory_space<vmem>>, vector<2x128xf32>,
    return
  }
  func.func @transform_0(%arg0: i32) -> (i32, i32) {
    %c0_i32 = arith.constant 0 : i32
    %c0_i32_0 = arith.constant 0 : i32
    return %c0_i32, %arg0 : i32, i32
  }
  func.func @transform_1(%arg0: i32) -> (i32, i32) {
    %c0_i32 = arith.constant 0 : i32
    %c0_i32_0 = arith.constant 0 : i32
    %c0_i32_1 = arith.constant 0 : i32
    return %c0_i32, %c0_i32_0 : i32, i32
  }
  func.func @transform_2(%arg0: i32) -> (i32, i32) {
    %c0_i32 = arith.constant 0 : i32
    %c0_i32_0 = arith.constant 0 : i32
    %c0_i32_1 = arith.constant 0 : i32
    return %c0_i32, %c0_i32_0 : i32, i32
  }
  func.func @transform_3(%arg0: i32) -> (i32, i32) {
    %c0_i32 = arith.constant 0 : i32
    %c0_i32_0 = arith.constant 0 : i32
    %c0_i32_1 = arith.constant 0 : i32
    return %c0_i32, %c0_i32_0 : i32, i32
  }
  func.func @transform_4(%arg0: i32) -> (i32, i32) {
    %c0_i32 = arith.constant 0 : i32
    %c0_i32_0 = arith.constant 0 : i32
    %c0_i32_1 = arith.constant 0 : i32
    return %c0_i32, %c0_i32_0 : i32, i32
  }
  func.func @transform_5(%arg0: i32) -> (i32, i32) {
    %c0_i32 = arith.constant 0 : i32
    %c0_i32_0 = arith.constant 0 : i32
    return %c0_i32, %arg0 : i32, i32
  }
}

</mosaic_0001>

<llo_original>
// kernel: mlp_pallas.1
$region0: #{mlp_pallas.1}
  #allocation0 [shape = 'u32[]', space=smem, size = 0x4, offset = 0x4, fixed_abs, tag = 'smem constant byte address 0x4 - core index']
  #allocation1 [shape = 'u32[72,128]{1,0:T(1,128)}', space=vmem, size = 0x9000, scoped, tag = 'internal scratch']
  %s0 = inlined_call_operand.vmem [shape: f32[7,128], index: 0, kind: input, shape index: {}]
  %s1 = inlined_call_operand.vmem [shape: bf16[64,7], index: 1, kind: input, shape index: {}]
  %s2 = inlined_call_operand.vmem [shape: f32[64,1], index: 2, kind: input, shape index: {}]
  %s3 = inlined_call_operand.vmem [shape: bf16[2,64], index: 3, kind: input, shape index: {}]
  %s4 = inlined_call_operand.vmem [shape: f32[2,1], index: 4, kind: input, shape index: {}]
  %s5 = inlined_call_operand.vmem [shape: f32[2,128], index: 5, kind: output, shape index: {}]
  %s6 = sld [smem:[#allocation0]]
  $region30: #{mlp_pallas.1} parent=0
    _
  %s8 = ssub.s32 1, %s6
  %s9 = scalar_select 0, %s8, %s6
  // Predicated region
  $region2: #{mlp_pallas.1} parent=0 // pred_check
    _
  $region3: #{mlp_pallas.1} parent=0 // pred_check_branch
    %11 = sbr.rel (0) target = $region5
  $region4: #{mlp_pallas.1} parent=0 // pred_region
    _
  $region5: #{mlp_pallas.1} parent=0 // pred_fallthru
    _
  // Predicated region
  $region6: #{mlp_pallas.1} parent=0 // pred_check
    _
  $region7: #{mlp_pallas.1} parent=0 // pred_check_branch
    %13 = sbr.rel (0) target = $region9
  $region8: #{mlp_pallas.1} parent=0 // pred_region
    _
  $region9: #{mlp_pallas.1} parent=0 // pred_fallthru
    _
  // Predicated region
  $region10: #{mlp_pallas.1} parent=0 // pred_check
    _
  $region11: #{mlp_pallas.1} parent=0 // pred_check_branch
    %15 = sbr.rel (0) target = $region13
  $region12: #{mlp_pallas.1} parent=0 // pred_region
    _
  $region13: #{mlp_pallas.1} parent=0 // pred_fallthru
    _
  // Predicated region
  $region14: #{mlp_pallas.1} parent=0 // pred_check
    _
  $region15: #{mlp_pallas.1} parent=0 // pred_check_branch
    %17 = sbr.rel (0) target = $region17
  $region16: #{mlp_pallas.1} parent=0 // pred_region
    _
  $region17: #{mlp_pallas.1} parent=0 // pred_fallthru
    _
  // Predicated region
  $region18: #{mlp_pallas.1} parent=0 // pred_check
    _
  $region19: #{mlp_pallas.1} parent=0 // pred_check_branch
    %19 = sbr.rel (0) target = $region21
  $region20: #{mlp_pallas.1} parent=0 // pred_region
    _
  $region21: #{mlp_pallas.1} parent=0 // pred_fallthru
    _
  %v21 = vld [vmem:[%s0] sm:$0x7f]
  %v22 = vpack.c.bf16 %v21, %v21
  %v23 = vld [vmem:[%s1] sm:$0xf]
  %v24 = vld [vmem:[%s1 + $0x4] sm:$0xf]
  %v25 = vld [vmem:[%s1 + $0x8] sm:$0xf]
  %v26 = vld [vmem:[%s1 + $0xc] sm:$0xf]
  %v27 = vld [vmem:[%s1 + $0x10] sm:$0xf]
  %v28 = vld [vmem:[%s1 + $0x14] sm:$0xf]
  %v29 = vld [vmem:[%s1 + $0x18] sm:$0xf]
  %v30 = vld [vmem:[%s1 + $0x1c] sm:$0xf]
  %v31 = vld [vmem:[%s2] sm:$0xff]
  %v32 = vld [vmem:[%s2 + $0x8] sm:$0xff]
  %v33 = vld [vmem:[%s2 + $0x10] sm:$0xff]
  %v34 = vld [vmem:[%s2 + $0x18] sm:$0xff]
  %v35 = vld [vmem:[%s2 + $0x20] sm:$0xff]
  %v36 = vld [vmem:[%s2 + $0x28] sm:$0xff]
  %v37 = vld [vmem:[%s2 + $0x30] sm:$0xff]
  %v38 = vld [vmem:[%s2 + $0x38] sm:$0xff]
  %40 = vset.pattern.permute.xlu0 0
  %41 = vperm.xlu0 %40, %v31
  %v42 = vpop.permute.xlu0 %41
  %45 = vset.pattern.permute.xlu0 0
  %46 = vperm.xlu0 %45, %v32
  %v47 = vpop.permute.xlu0 %46
  %50 = vset.pattern.permute.xlu0 0
  %51 = vperm.xlu0 %50, %v33
  %v52 = vpop.permute.xlu0 %51
  %55 = vset.pattern.permute.xlu0 0
  %56 = vperm.xlu0 %55, %v34
  %v57 = vpop.permute.xlu0 %56
  %60 = vset.pattern.permute.xlu0 0
  %61 = vperm.xlu0 %60, %v35
  %v62 = vpop.permute.xlu0 %61
  %65 = vset.pattern.permute.xlu0 0
  %66 = vperm.xlu0 %65, %v36
  %v67 = vpop.permute.xlu0 %66
  %70 = vset.pattern.permute.xlu0 0
  %71 = vperm.xlu0 %70, %v37
  %v72 = vpop.permute.xlu0 %71
  %75 = vset.pattern.permute.xlu0 0
  %76 = vperm.xlu0 %75, %v38
  %v77 = vpop.permute.xlu0 %76
  %v87 = vunpack.c.l.b16 %v23
  %v88 = vunpack.c.l.b16 %v24
  %v89 = vunpack.c.l.b16 %v25
  %v90 = vunpack.c.l.b16 %v26
  %v91 = vunpack.c.l.b16 %v27
  %v92 = vunpack.c.l.b16 %v28
  %v93 = vunpack.c.l.b16 %v29
  %v94 = vunpack.c.l.b16 %v30
  %v95 = vpack.c.b16 %v88, %v87
  %v96 = vpack.c.b16 %v90, %v89
  %v97 = vpack.c.b16 %v92, %v91
  %v98 = vpack.c.b16 %v94, %v93
  %vm99 = vcmask 56320
  %v101 = vsel %vm99, %v95, 0
  %v104 = vsel %vm99, %v96, 0
  %v107 = vsel %vm99, %v97, 0
  %v110 = vsel %vm99, %v98, 0
  %vm112 = vcmask 1042432
  %vm113 = vcmask 1043456
  %v114 = vsel %vm112, 4294967295, 65535
  %v115 = vsel %vm113, %v114, 0
  %v117 = vand.u32 %v22, %v115
  %119 = vmatpush.bf16.msra.mxu0 0
  %120 = vmatpush.bf16.msra.mxu0 0
  %121 = vmatpush.bf16.msra.mxu0 0
  %122 = vmatpush.bf16.msra.mxu0 0
  %123 = vmatpush.bf16.msra.mxu0 0
  %124 = vmatpush.bf16.msra.mxu0 0
  %125 = vmatpush.bf16.msra.mxu0 0
  %126 = vmatpush.bf16.msra.mxu0 %v117
  %127 = vmatmul.bf16.gmra.mxu0 %v101
  %v128 = vpop.f32.mrf.mxu0
  %v129 = vadd.f32 %v42, %v128
  %v130 = vpop.f32.mrf.mxu0
  %v131 = vadd.f32 %v47, %v130
  %132 = vmatmul.bf16.gmra.mxu0 %v104
  %v133 = vpop.f32.mrf.mxu0
  %v134 = vadd.f32 %v52, %v133
  %v135 = vpop.f32.mrf.mxu0
  %v136 = vadd.f32 %v57, %v135
  %137 = vmatmul.bf16.gmra.mxu0 %v107
  %v138 = vpop.f32.mrf.mxu0
  %v139 = vadd.f32 %v62, %v138
  %v140 = vpop.f32.mrf.mxu0
  %v141 = vadd.f32 %v67, %v140
  %142 = vmatmul.bf16.gmra.mxu0 %v110
  %v143 = vpop.f32.mrf.mxu0
  %v144 = vadd.f32 %v72, %v143
  %v145 = vpop.f32.mrf.mxu0
  %v146 = vadd.f32 %v77, %v145
  %147 = vdwg.mxu0
  %v148 = vmul.f32 %v129, 0.01
  %v149 = vmul.f32 %v131, 0.01
  %v150 = vmul.f32 %v134, 0.01
  %v151 = vmul.f32 %v136, 0.01
  %v152 = vmul.f32 %v139, 0.01
  %v153 = vmul.f32 %v141, 0.01
  %v154 = vmul.f32 %v144, 0.01
  %v155 = vmul.f32 %v146, 0.01
  %v156 = vmax.f32 %v129, %v148
  %v157 = vmax.f32 %v131, %v149
  %v158 = vmax.f32 %v134, %v150
  %v159 = vmax.f32 %v136, %v151
  %v160 = vmax.f32 %v139, %v152
  %v161 = vmax.f32 %v141, %v153
  %v162 = vmax.f32 %v144, %v154
  %v163 = vmax.f32 %v146, %v155
  %v164 = vld [vmem:[%s3] sm:$0x1]
  %v165 = vpack.c.bf16 %v157, %v156
  %v166 = vpack.c.bf16 %v159, %v158
  %v167 = vpack.c.bf16 %v161, %v160
  %v168 = vpack.c.bf16 %v163, %v162
  %v169 = vld [vmem:[%s4] sm:$0x3]
  %171 = vset.pattern.permute.xlu0 0
  %172 = vperm.xlu0 %171, %v169
  %v173 = vpop.permute.xlu0 %172
  %vm175 = vcmask 523264
  %v177 = vsel %vm175, %v164, 0
  %179 = vmatpush.bf16.msra.mxu0 0
  %180 = vmatpush.bf16.msra.mxu0 0
  %181 = vmatpush.bf16.msra.mxu0 0
  %182 = vmatpush.bf16.msra.mxu0 0
  %183 = vmatpush.bf16.msra.mxu0 %v168
  %184 = vmatpush.bf16.msra.mxu0 %v167
  %185 = vmatpush.bf16.msra.mxu0 %v166
  %186 = vmatpush.bf16.msra.mxu0 %v165
  %187 = vmatmul.bf16.gmra.mxu0 %v177
  %v188 = vpop.f32.mrf.mxu0
  %v189 = vadd.f32 %v173, %v188
  %v190 = vpop.f32.mrf.mxu0
  %191 = vdwg.mxu0
  %v192 = vmul.f32 %v189, 0.01
  %v193 = vmax.f32 %v189, %v192
  %194 = vst [vmem:[%s5] sm:$0x3] %v193
  // Predicated region
  $region22: #{mlp_pallas.1} parent=0 // pred_check
    _
  $region23: #{mlp_pallas.1} parent=0 // pred_check_branch
    %196 = sbr.rel (0) target = $region25
  $region24: #{mlp_pallas.1} parent=0 // pred_region
    _
  $region25: #{mlp_pallas.1} parent=0 // pred_fallthru
    _
  // Predicated region
  $region26: #{mlp_pallas.1} parent=0 // pred_check
    _
  $region27: #{mlp_pallas.1} parent=0 // pred_check_branch
    %198 = sbr.rel (0) target = $region29
  $region28: #{mlp_pallas.1} parent=0 // pred_region
    _
  $region29: #{mlp_pallas.1} parent=0 // pred_fallthru
    _

</llo_original>
